<compile_context>
chip_gen: v7x
topology: tpu7x:2x2x1
jax: 0.10.0
libtpu: 0.0.40
codegen_flags: <defaults>
</compile_context>

<pallas_src>
import functools

import jax
import jax.numpy as jnp
from jax.experimental import pallas as pl
from jax.experimental.pallas import tpu as pltpu


def _fused_kernel(x_ref, w1_ref, b1_ref, w2_ref, b2_ref, pi_ref, vf_ref,
                  *, p1, h1_total, h_pi):
    x_f32 = x_ref[...]                                     # (TB, F) f32
    x = x_f32.astype(jnp.bfloat16)

    # ---- fused first layers of all three nets: one MXU push -----------------
    h = jnp.dot(x, w1_ref[...], preferred_element_type=jnp.float32)
    h = jnp.maximum(h + b1_ref[...], 0.0)                  # (TB, 2*P1 + V1) f32

    # ---- routing: row uses the transform net iff features[row, -1] == 0 -----
    # (compare kept in f32; matches the PyTorch forward_actor semantics)
    is_trans = (x_f32[:, -1:] == 0.0)                      # (TB, 1) bool
    mask = is_trans.astype(jnp.float32)

    # Lane gate: transform-columns get `mask`, actor-columns `1-mask`,
    # value-columns 1.  Moves the select before the second matmul.
    lane = jax.lax.broadcasted_iota(jnp.int32, (1, h1_total), 1)
    sel_t = (lane < p1).astype(jnp.float32)
    sel_a = jnp.logical_and(lane >= p1, lane < 2 * p1).astype(jnp.float32)
    sel_v = (lane >= 2 * p1).astype(jnp.float32)
    gate = sel_t * mask + sel_a * (1.0 - mask) + sel_v     # (TB, H1_total)
    h_gated = (h * gate).astype(jnp.bfloat16)

    # ---- fused second layers (block-structured weights): one MXU push -------
    b2 = b2_ref[...]                                       # (2, Hpi+Hvf) f32
    bias = jnp.where(is_trans, b2[0:1, :], b2[1:2, :])     # per-row b2t vs b2a (b2v same)
    y = jnp.dot(h_gated, w2_ref[...], preferred_element_type=jnp.float32) + bias

    pi_ref[...] = y[:, :h_pi]                              # latent_pi
    vf_ref[...] = jnp.maximum(y[:, h_pi:], 0.0)            # value net trailing ReLU


def pack_params(p):
    """Pack per-net weights into MXU-friendly slabs (bf16 weights, f32 biases)."""
    w1t, w1a, w1v = p["w1t"], p["w1a"], p["w1v"]
    w2t, w2a, w2v = p["w2t"], p["w2a"], p["w2v"]
    P1, V1 = w1t.shape[1], w1v.shape[1]
    Hpi, Hvf = w2t.shape[1], w2v.shape[1]

    w1_cat = jnp.concatenate([w1t, w1a, w1v], axis=1).astype(jnp.bfloat16)
    b1_cat = jnp.concatenate([p["b1t"], p["b1a"], p["b1v"]], axis=1).astype(jnp.float32)

    # Block-structured second-layer weights:
    #   rows [0,P1)      x cols [0,Hpi)        -> w2t
    #   rows [P1,2P1)    x cols [0,Hpi)        -> w2a
    #   rows [2P1,2P1+V1) x cols [Hpi,Hpi+Hvf) -> w2v     (other blocks zero)
    w2_cat = jnp.zeros((2 * P1 + V1, Hpi + Hvf), jnp.float32)
    w2_cat = w2_cat.at[:P1, :Hpi].set(w2t)
    w2_cat = w2_cat.at[P1:2 * P1, :Hpi].set(w2a)
    w2_cat = w2_cat.at[2 * P1:, Hpi:].set(w2v)
    w2_cat = w2_cat.astype(jnp.bfloat16)

    # Row 0: [b2t | b2v], row 1: [b2a | b2v]; per-row select picks the row.
    b2_slab = jnp.stack([
        jnp.concatenate([p["b2t"][0], p["b2v"][0]]),
        jnp.concatenate([p["b2a"][0], p["b2v"][0]]),
    ]).astype(jnp.float32)                                 # (2, Hpi+Hvf)

    return w1_cat, b1_cat, w2_cat, b2_slab, (P1, 2 * P1 + V1, Hpi, Hvf)


def transform_network_forward(features, params, *, tile_b=None):
    """features: (B, F) f32.  Returns (latent_pi (B, Hpi), latent_vf (B, Hvf))."""
    B, F = features.shape
    w1_cat, b1_cat, w2_cat, b2_slab, (P1, H1_total, Hpi, Hvf) = pack_params(params)

    if tile_b is None:
        tile_b = B if B <= 256 else 256
    # TODO(synk): support a ragged final batch tile; for now require divisibility.
    assert B % tile_b == 0, "batch must be divisible by the batch tile"
    grid = (B // tile_b,)

    kernel = functools.partial(_fused_kernel, p1=P1, h1_total=H1_total, h_pi=Hpi)

    return pl.pallas_call(
        kernel,
        out_shape=(
            jax.ShapeDtypeStruct((B, Hpi), jnp.float32),
            jax.ShapeDtypeStruct((B, Hvf), jnp.float32),
        ),
        grid=grid,
        in_specs=[
            pl.BlockSpec((tile_b, F), lambda i: (i, 0)),          # x streams per tile
            pl.BlockSpec((F, H1_total), lambda i: (0, 0)),        # weights stay resident
            pl.BlockSpec((1, H1_total), lambda i: (0, 0)),
            pl.BlockSpec((H1_total, Hpi + Hvf), lambda i: (0, 0)),
            pl.BlockSpec((2, Hpi + Hvf), lambda i: (0, 0)),
        ],
        out_specs=(
            pl.BlockSpec((tile_b, Hpi), lambda i: (i, 0)),
            pl.BlockSpec((tile_b, Hvf), lambda i: (i, 0)),
        ),
        compiler_params=pltpu.CompilerParams(
            dimension_semantics=("parallel",),   # batch tiles shard across TCs (v7x)
        ),
    )(features, w1_cat, b1_cat, w2_cat, b2_slab)


def init_params(key, feature_dim, first_pi=128, last_pi=128, first_vf=128, last_vf=128):
    # NOTE: the PyTorch module wires value_net's 2nd Linear with fan-in
    # first_layer_dim_pi; with the module defaults first_pi == first_vf, so the
    # packed layout is well formed.  We require equality explicitly.
    assert first_pi == first_vf, "packed layout requires first_pi == first_vf"
    ks = jax.random.split(key, 12)

    def lin(kw, kb, fan_in, fan_out):
        w = jax.random.normal(kw, (fan_in, fan_out), jnp.float32) * 0.05
        b = jax.random.normal(kb, (1, fan_out), jnp.float32) * 0.01
        return w, b

    w1t, b1t = lin(ks[0], ks[1], feature_dim, first_pi)
    w2t, b2t = lin(ks[2], ks[3], first_pi, last_pi)
    w1a, b1a = lin(ks[4], ks[5], feature_dim, first_pi)
    w2a, b2a = lin(ks[6], ks[7], first_pi, last_pi)
    w1v, b1v = lin(ks[8], ks[9], feature_dim, first_vf)
    w2v, b2v = lin(ks[10], ks[11], first_vf, last_vf)
    return dict(w1t=w1t, b1t=b1t, w2t=w2t, b2t=b2t,
                w1a=w1a, b1a=b1a, w2a=w2a, b2a=b2a,
                w1v=w1v, b1v=b1v, w2v=w2v, b2v=b2v)


def reference_forward_f32(features, p):
    """Pure-f32 JAX reference mirroring the PyTorch semantics."""
    def mlp(x, w1, b1, w2, b2):
        return jnp.maximum(x @ w1 + b1, 0.0) @ w2 + b2
    y_t = mlp(features, p["w1t"], p["b1t"], p["w2t"], p["b2t"])
    y_a = mlp(features, p["w1a"], p["b1a"], p["w2a"], p["b2a"])
    mask = (features[:, -1:] == 0.0)
    latent_pi = jnp.where(mask, y_t, y_a)
    latent_vf = jnp.maximum(mlp(features, p["w1v"], p["b1v"], p["w2v"], p["b2v"]), 0.0)
    return latent_pi, latent_vf


def reference_forward_bf16(features, p):
    """Reference with the kernel's bf16-inputs / f32-accumulation recipe."""
    bf = jnp.bfloat16
    xb = features.astype(bf)

    def mlp(w1, b1, w2, b2):
        h = jnp.maximum(
            jnp.dot(xb, w1.astype(bf), preferred_element_type=jnp.float32) + b1, 0.0)
        return jnp.dot(h.astype(bf), w2.astype(bf),
                       preferred_element_type=jnp.float32) + b2

    y_t = mlp(p["w1t"], p["b1t"], p["w2t"], p["b2t"])
    y_a = mlp(p["w1a"], p["b1a"], p["w2a"], p["b2a"])
    mask = (features[:, -1:] == 0.0)
    latent_pi = jnp.where(mask, y_t, y_a)
    latent_vf = jnp.maximum(mlp(p["w1v"], p["b1v"], p["w2v"], p["b2v"]), 0.0)
    return latent_pi, latent_vf


if __name__ == "__main__":
    B, F = 8, 32  # small batch, feature_dim=32; hidden dims use module defaults (128)
    key = jax.random.PRNGKey(0)
    k_x, k_p = jax.random.split(key)

    x = jax.random.normal(k_x, (B, F), jnp.float32)
    # make the routing flag (last feature) meaningful: half 0, half 1
    flags = (jnp.arange(B) % 2).astype(jnp.float32)
    x = x.at[:, -1].set(flags)

    params = init_params(k_p, F)

    latent_pi, latent_vf = transform_network_forward(x, params)
    jax.block_until_ready((latent_pi, latent_vf))

    # Tight check vs a quantization-matched (bf16 weights, f32 accum) reference.
    ref_pi, ref_vf = reference_forward_bf16(x, params)
    assert jnp.allclose(latent_pi, ref_pi, atol=5e-4, rtol=5e-4), \
        float(jnp.max(jnp.abs(latent_pi - ref_pi)))
    assert jnp.allclose(latent_vf, ref_vf, atol=5e-4, rtol=5e-4), \
        float(jnp.max(jnp.abs(latent_vf - ref_vf)))

    # Loose sanity check vs the full-f32 reference (bf16 quantization error only).
    f32_pi, f32_vf = reference_forward_f32(x, params)
    assert jnp.allclose(latent_pi, f32_pi, atol=5e-2, rtol=5e-2)
    assert jnp.allclose(latent_vf, f32_vf, atol=5e-2, rtol=5e-2)

    print("KERNEL_OK")
</pallas_src>

<mosaic_0001>
module attributes {stable_mosaic.version = 11 : i64} {
  func.func @_fused_kernel(%arg0: i32, %arg1: memref<8x32xf32, #tpu.memory_space<vmem>>, %arg2: memref<32x384xbf16, #tpu.memory_space<vmem>>, %arg3: memref<1x384xf32, #tpu.memory_space<vmem>>, %arg4: memref<384x256xbf16, #tpu.memory_space<vmem>>, %arg5: memref<2x256xf32, #tpu.memory_space<vmem>>, %arg6: memref<8x128xf32, #tpu.memory_space<vmem>>, %arg7: memref<8x128xf32, #tpu.memory_space<vmem>>) attributes {dimension_semantics = [#tpu.dimension_semantics<parallel>], iteration_bounds = array<i64: 1>, scalar_prefetch = 0 : i64, scratch_operands = 0 : i64, tpu.core_type = #tpu.core_type<tc>, window_params = [{transform_indices = @transform_0, window_bounds = array<i64: 8, 32>}, {pipeline_mode = #tpu.pipeline_mode<synchronous>, transform_indices = @transform_1, window_bounds = array<i64: 32, 384>}, {pipeline_mode = #tpu.pipeline_mode<synchronous>, transform_indices = @transform_2, window_bounds = array<i64: 1, 384>}, {pipeline_mode = #tpu.pipeline_mode<synchronous>, transform_indices = @transform_3, window_bounds = array<i64: 384, 256>}, {pipeline_mode = #tpu.pipeline_mode<synchronous>, transform_indices = @transform_4, window_bounds = array<i64: 2, 256>}, {transform_indices = @transform_5, window_bounds = array<i64: 8, 128>}, {transform_indices = @transform_6, window_bounds = array<i64: 8, 128>}]} {
    %c0 = arith.constant 0 : index
    %c0_0 = arith.constant 0 : index
    %0 = vector.load %arg1[%c0, %c0_0] : memref<8x32xf32, #tpu.memory_space<vmem>>, vector<8x32xf32>
    %1 = arith.truncf %0 : vector<8x32xf32> to vector<8x32xbf16>
    %c0_1 = arith.constant 0 : index
    %c0_2 = arith.constant 0 : index
    %2 = vector.load %arg2[%c0_1, %c0_2] : memref<32x384xbf16, #tpu.memory_space<vmem>>, vector<32x384xbf16>
    %cst = arith.constant dense<0.000000e+00> : vector<8x384xf32>
    %3 = tpu.matmul %1, %2, %cst {dimension_numbers = #tpu.dot_dimension_numbers<[1], [0], [0], [1], [0, 0, 1, 1], [], []>} : vector<8x32xbf16>, vector<32x384xbf16>, vector<8x384xf32> -> vector<8x384xf32>
    %c0_3 = arith.constant 0 : index
    %c0_4 = arith.constant 0 : index
    %4 = vector.load %arg3[%c0_3, %c0_4] : memref<1x384xf32, #tpu.memory_space<vmem>>, vector<1x384xf32>
    %5 = vector.broadcast %4 : vector<1x384xf32> to vector<8x384xf32>
    %6 = arith.addf %3, %5 : vector<8x384xf32>
    %cst_5 = arith.constant 0.000000e+00 : f32
    %7 = vector.broadcast %cst_5 : f32 to vector<8x384xf32>
    %8 = arith.maximumf %6, %7 : vector<8x384xf32>
    %9 = vector.extract_strided_slice %0 {offsets = [0, 31], sizes = [8, 1], strides = [1, 1]} : vector<8x32xf32> to vector<8x1xf32>
    %cst_6 = arith.constant 0.000000e+00 : f32
    %10 = vector.broadcast %cst_6 : f32 to vector<8x1xf32>
    %11 = arith.cmpf oeq, %9, %10 : vector<8x1xf32>
    %12 = arith.extui %11 : vector<8x1xi1> to vector<8x1xi32>
    %13 = arith.sitofp %12 : vector<8x1xi32> to vector<8x1xf32>
    %14 = tpu.iota {dimensions = array<i32: 1>} : vector<1x384xi32>
    %c128_i32 = arith.constant 128 : i32
    %15 = vector.broadcast %c128_i32 : i32 to vector<1x384xi32>
    %16 = arith.cmpi slt, %14, %15 : vector<1x384xi32>
    %17 = arith.extui %16 : vector<1x384xi1> to vector<1x384xi32>
    %18 = arith.sitofp %17 : vector<1x384xi32> to vector<1x384xf32>
    %c128_i32_7 = arith.constant 128 : i32
    %19 = vector.broadcast %c128_i32_7 : i32 to vector<1x384xi32>
    %20 = arith.cmpi sge, %14, %19 : vector<1x384xi32>
    %c256_i32 = arith.constant 256 : i32
    %21 = vector.broadcast %c256_i32 : i32 to vector<1x384xi32>
    %22 = arith.cmpi slt, %14, %21 : vector<1x384xi32>
    %23 = arith.andi %20, %22 : vector<1x384xi1>
    %24 = arith.extui %23 : vector<1x384xi1> to vector<1x384xi32>
    %25 = arith.sitofp %24 : vector<1x384xi32> to vector<1x384xf32>
    %c256_i32_8 = arith.constant 256 : i32
    %26 = vector.broadcast %c256_i32_8 : i32 to vector<1x384xi32>
    %27 = arith.cmpi sge, %14, %26 : vector<1x384xi32>
    %28 = arith.extui %27 : vector<1x384xi1> to vector<1x384xi32>
    %29 = arith.sitofp %28 : vector<1x384xi32> to vector<1x384xf32>
    %30 = vector.broadcast %18 : vector<1x384xf32> to vector<8x384xf32>
    %31 = vector.broadcast %13 : vector<8x1xf32> to vector<8x384xf32>
    %32 = arith.mulf %30, %31 : vector<8x384xf32>
    %cst_9 = arith.constant 1.000000e+00 : f32
    %33 = vector.broadcast %cst_9 : f32 to vector<8x1xf32>
    %34 = arith.subf %33, %13 : vector<8x1xf32>
    %35 = vector.broadcast %25 : vector<1x384xf32> to vector<8x384xf32>
    %36 = vector.broadcast %34 : vector<8x1xf32> to vector<8x384xf32>
    %37 = arith.mulf %35, %36 : vector<8x384xf32>
    %38 = arith.addf %32, %37 : vector<8x384xf32>
    %39 = vector.broadcast %29 : vector<1x384xf32> to vector<8x384xf32>
    %40 = arith.addf %38, %39 : vector<8x384xf32>
    %41 = arith.mulf %8, %40 : vector<8x384xf32>
    %42 = arith.truncf %41 : vector<8x384xf32> to vector<8x384xbf16>
    %c0_10 = arith.constant 0 : index
    %c0_11 = arith.constant 0 : index
    %43 = vector.load %arg5[%c0_10, %c0_11] : memref<2x256xf32, #tpu.memory_space<vmem>>, vector<2x256xf32>
    %44 = vector.extract_strided_slice %43 {offsets = [0, 0], sizes = [1, 256], strides = [1, 1]} : vector<2x256xf32> to vector<1x256xf32>
    %45 = vector.extract_strided_slice %43 {offsets = [1, 0], sizes = [1, 256], strides = [1, 1]} : vector<2x256xf32> to vector<1x256xf32>
    %46 = vector.shape_cast %11 : vector<8x1xi1> to vector<8x1xi1>
    %47 = vector.broadcast %46 : vector<8x1xi1> to vector<8x256xi1>
    %48 = vector.shape_cast %44 : vector<1x256xf32> to vector<1x256xf32>
    %49 = vector.broadcast %48 : vector<1x256xf32> to vector<8x256xf32>
    %50 = vector.shape_cast %45 : vector<1x256xf32> to vector<1x256xf32>
    %51 = vector.broadcast %50 : vector<1x256xf32> to vector<8x256xf32>
    %52 = arith.select %47, %49, %51 : vector<8x256xi1>, vector<8x256xf32>
    %c0_12 = arith.constant 0 : index
    %c0_13 = arith.constant 0 : index
    %53 = vector.load %arg4[%c0_12, %c0_13] : memref<384x256xbf16, #tpu.memory_space<vmem>>, vector<384x256xbf16>
    %cst_14 = arith.constant dense<0.000000e+00> : vector<8x256xf32>
    %54 = tpu.matmul %42, %53, %cst_14 {dimension_numbers = #tpu.dot_dimension_numbers<[1], [0], [0], [1], [0, 0, 1, 1], [], []>} : vector<8x384xbf16>, vector<384x256xbf16>, vector<8x256xf32> -> vector<8x256xf32>
    %55 = arith.addf %54, %52 : vector<8x256xf32>
    %56 = vector.extract_strided_slice %55 {offsets = [0, 0], sizes = [8, 128], strides = [1, 1]} : vector<8x256xf32> to vector<8x128xf32>
    %c0_15 = arith.constant 0 : index
    %c0_16 = arith.constant 0 : index
    %57 = vector.load %arg6[%c0_15, %c0_16] : memref<8x128xf32, #tpu.memory_space<vmem>>, vector<8x128xf32>
    tpu.vector_store %arg6[%c0_15, %c0_16], %56 {strides = array<i32>} : memref<8x128xf32, #tpu.memory_space<vmem>>, vector<8x128xf32>,
    %58 = vector.extract_strided_slice %55 {offsets = [0, 128], sizes = [8, 128], strides = [1, 1]} : vector<8x256xf32> to vector<8x128xf32>
    %cst_17 = arith.constant 0.000000e+00 : f32
    %59 = vector.broadcast %cst_17 : f32 to vector<8x128xf32>
    %60 = arith.maximumf %58, %59 : vector<8x128xf32>
    %c0_18 = arith.constant 0 : index
    %c0_19 = arith.constant 0 : index
    %61 = vector.load %arg7[%c0_18, %c0_19] : memref<8x128xf32, #tpu.memory_space<vmem>>, vector<8x128xf32>
    tpu.vector_store %arg7[%c0_18, %c0_19], %60 {strides = array<i32>} : memref<8x128xf32, #tpu.memory_space<vmem>>, vector<8x128xf32>,
    return
  }
  func.func @transform_0(%arg0: i32) -> (i32, i32) {
    %c0_i32 = arith.constant 0 : i32
    %c0_i32_0 = arith.constant 0 : i32
    return %arg0, %c0_i32 : i32, i32
  }
  func.func @transform_1(%arg0: i32) -> (i32, i32) {
    %c0_i32 = arith.constant 0 : i32
    %c0_i32_0 = arith.constant 0 : i32
    %c0_i32_1 = arith.constant 0 : i32
    return %c0_i32, %c0_i32_0 : i32, i32
  }
  func.func @transform_2(%arg0: i32) -> (i32, i32) {
    %c0_i32 = arith.constant 0 : i32
    %c0_i32_0 = arith.constant 0 : i32
    %c0_i32_1 = arith.constant 0 : i32
    return %c0_i32, %c0_i32_0 : i32, i32
  }
  func.func @transform_3(%arg0: i32) -> (i32, i32) {
    %c0_i32 = arith.constant 0 : i32
    %c0_i32_0 = arith.constant 0 : i32
    %c0_i32_1 = arith.constant 0 : i32
    return %c0_i32, %c0_i32_0 : i32, i32
  }
  func.func @transform_4(%arg0: i32) -> (i32, i32) {
    %c0_i32 = arith.constant 0 : i32
    %c0_i32_0 = arith.constant 0 : i32
    %c0_i32_1 = arith.constant 0 : i32
    return %c0_i32, %c0_i32_0 : i32, i32
  }
  func.func @transform_5(%arg0: i32) -> (i32, i32) {
    %c0_i32 = arith.constant 0 : i32
    %c0_i32_0 = arith.constant 0 : i32
    return %arg0, %c0_i32 : i32, i32
  }
  func.func @transform_6(%arg0: i32) -> (i32, i32) {
    %c0_i32 = arith.constant 0 : i32
    %c0_i32_0 = arith.constant 0 : i32
    return %arg0, %c0_i32 : i32, i32
  }
}

</mosaic_0001>

<llo_original>
// kernel: tpu_custom_call.1
$region0: #{tpu_custom_call.1}
  #allocation0 [shape = 'u32[]', space=smem, size = 0x4, offset = 0x4, fixed_abs, tag = 'smem constant byte address 0x4 - core index']
  #allocation1 [shape = 'u32[144,128]{1,0:T(1,128)}', space=vmem, size = 0x12000, scoped, tag = 'internal scratch']
  %s0 = inlined_call_operand.hbm [shape: f32[8,32], index: 0, kind: input, shape index: {}]
  %s1 = inlined_call_operand.hbm [shape: bf16[32,384], index: 1, kind: input, shape index: {}]
  %s2 = inlined_call_operand.vmem [shape: f32[1,384], index: 2, kind: input, shape index: {}]
  %s3 = inlined_call_operand.hbm [shape: bf16[384,256], index: 3, kind: input, shape index: {}]
  %s4 = inlined_call_operand.vmem [shape: f32[2,256], index: 4, kind: input, shape index: {}]
  %s5 = inlined_call_operand.hbm [shape: f32[8,128], index: 5, kind: output, shape index: {0}]
  %s6 = inlined_call_operand.hbm [shape: f32[8,128], index: 6, kind: output, shape index: {1}]
  %7 = xla_tuple %s5, %s6
  %s8 = sld [smem:[#allocation0]]
  $region50: #{tpu_custom_call.1} parent=0
    _
  %s10 = ssub.s32 1, %s8
  %s11 = scalar_select 0, %s10, %s8
  $region1: #{tpu_custom_call.1} parent=0
    #allocation2 [shape = 'u8[4096]{0}', space=vmem, size = 0x1000, scoped, tag = 'input window, operand 0, single buffered']
    #allocation3 [shape = 's32[1]{0}', space=sflag, size = 0x4, scoped, tag = 'scoped memory for tpu_custom_call.1']
    #allocation4 [shape = 's32[1]{0}', space=sflag, size = 0x4, scoped, tag = 'scoped memory for tpu_custom_call.1']
    #allocation5 [shape = 'u8[24576]{0}', space=vmem, size = 0x6000, scoped, tag = 'input window, operand 1, single buffered']
    #allocation6 [shape = 's32[1]{0}', space=sflag, size = 0x4, scoped, tag = 'scoped memory for tpu_custom_call.1']
    #allocation7 [shape = 'u8[196608]{0}', space=vmem, size = 0x30000, scoped, tag = 'input window, operand 3, single buffered']
    #allocation8 [shape = 'u8[4096]{0}', space=vmem, size = 0x1000, scoped, tag = 'output window, operand 0, single buffered']
    #allocation9 [shape = 'u8[4096]{0}', space=vmem, size = 0x1000, scoped, tag = 'output window, operand 1, single buffered']
    #allocation10 [shape = 's32[1]{0}', space=sflag, size = 0x4, scoped, tag = 'scoped memory for tpu_custom_call.1']
    %12 = vsyncpa [#allocation3], 0
    %13 = vsyncpa [#allocation6], 0
    %14 = vsyncpa [#allocation4], 0
    %15 = vsyncpa [#allocation10], 0
    // Predicated region
    $region2: #{tpu_custom_call.1} parent=1 // pred_check
      _
    $region3: #{tpu_custom_call.1} parent=1 // pred_check_branch
      %17 = sbr.rel (0) target = $region5
    $region4: #{tpu_custom_call.1} parent=1 // pred_region
      %s19 = ssub.s32 128, 128
      %20 = vsyncadd [#allocation3], %s19
      %s22 = sshll.u32 [#allocation2], 4
      %s23 = int_to_ptr.vmem [resolvable:$true] %s22
      %25 = dma.hbm_to_vmem [thread:$0]  %s0, 128, %s23, [#allocation3]
    $region5: #{tpu_custom_call.1} parent=1 // pred_fallthru
      _
    // Predicated region
    $region6: #{tpu_custom_call.1} parent=1 // pred_check
      _
    $region7: #{tpu_custom_call.1} parent=1 // pred_check_branch
      %27 = sbr.rel (0) target = $region9
    $region8: #{tpu_custom_call.1} parent=1 // pred_region
      %s29 = ssub.s32 768, 768
      %30 = vsyncadd [#allocation6], %s29
      %s31 = sshll.u32 [#allocation5], 4
      %s32 = int_to_ptr.vmem [resolvable:$true] %s31
      %37 = dma.hbm_to_vmem [thread:$0]  %s1, 768, %s32, [#allocation6], 192, 192, 12
    $region9: #{tpu_custom_call.1} parent=1 // pred_fallthru
      _
    // Predicated region
    $region10: #{tpu_custom_call.1} parent=1 // pred_check
      _
    $region11: #{tpu_custom_call.1} parent=1 // pred_check_branch
      %39 = sbr.rel (0) target = $region13
    $region12: #{tpu_custom_call.1} parent=1 // pred_region
      _
    $region13: #{tpu_custom_call.1} parent=1 // pred_fallthru
      _
    // Predicated region
    $region14: #{tpu_custom_call.1} parent=1 // pred_check
      _
    $region15: #{tpu_custom_call.1} parent=1 // pred_check_branch
      %41 = sbr.rel (0) target = $region17
    $region16: #{tpu_custom_call.1} parent=1 // pred_region
      %s43 = ssub.s32 6144, 6144
      %44 = vsyncadd [#allocation6], %s43
      %s45 = sshll.u32 [#allocation7], 4
      %s46 = int_to_ptr.vmem [resolvable:$true] %s45
      %51 = dma.hbm_to_vmem [thread:$0]  %s3, 6144, %s46, [#allocation6], 128, 128, 8
    $region17: #{tpu_custom_call.1} parent=1 // pred_fallthru
      _
    // Predicated region
    $region18: #{tpu_custom_call.1} parent=1 // pred_check
      _
    $region19: #{tpu_custom_call.1} parent=1 // pred_check_branch
      %53 = sbr.rel (0) target = $region21
    $region20: #{tpu_custom_call.1} parent=1 // pred_region
      _
    $region21: #{tpu_custom_call.1} parent=1 // pred_fallthru
      _
    // Predicated region
    $region22: #{tpu_custom_call.1} parent=1 // pred_check
      _
    $region23: #{tpu_custom_call.1} parent=1 // pred_check_branch
      %55 = sbr.rel (0) target = $region25
    $region24: #{tpu_custom_call.1} parent=1 // pred_region
      %56 = dma.done [#allocation3], 128
    $region25: #{tpu_custom_call.1} parent=1 // pred_fallthru
      _
    // Predicated region
    $region26: #{tpu_custom_call.1} parent=1 // pred_check
      _
    $region27: #{tpu_custom_call.1} parent=1 // pred_check_branch
      %58 = sbr.rel (0) target = $region29
    $region28: #{tpu_custom_call.1} parent=1 // pred_region
      %59 = dma.done [#allocation6], 768
    $region29: #{tpu_custom_call.1} parent=1 // pred_fallthru
      _
    // Predicated region
    $region30: #{tpu_custom_call.1} parent=1 // pred_check
      _
    $region31: #{tpu_custom_call.1} parent=1 // pred_check_branch
      %61 = sbr.rel (0) target = $region33
    $region32: #{tpu_custom_call.1} parent=1 // pred_region
      %62 = dma.done [#allocation6], 6144
    $region33: #{tpu_custom_call.1} parent=1 // pred_fallthru
      _
    %v64 = vld [vmem:[#allocation2] sm:$0xff]
    %v65 = vpack.c.bf16 %v64, %v64
    %v66 = vld [vmem:[#allocation5] sm:$0xff]
    %v67 = vld [vmem:[#allocation5 + $0x8] sm:$0xf]
    %v68 = vld [vmem:[#allocation5 + $0xc] sm:$0xff]
    %v69 = vld [vmem:[#allocation5 + $0x14] sm:$0xf]
    %v70 = vld [vmem:[#allocation5 + $0x18] sm:$0xff]
    %v71 = vld [vmem:[#allocation5 + $0x20] sm:$0xf]
    %v72 = vld [vmem:[#allocation5 + $0x24] sm:$0xff]
    %v73 = vld [vmem:[#allocation5 + $0x2c] sm:$0xf]
    %v74 = vld [vmem:[%s2] sm:$0x7]
    %v76 = vlaneseq
    %v77 = vshrl.u32 %v76, 7
    %v78 = vsub.s32 0, %v77
    %v79 = vrot.slane %v74, %v78
    %v80 = vlaneseq
    %v81 = vshrl.u32 %v80, 7
    %v82 = vsub.s32 1, %v81
    %v83 = vrot.slane %v74, %v82
    %v84 = vlaneseq
    %v85 = vshrl.u32 %v84, 7
    %v86 = vsub.s32 2, %v85
    %v87 = vrot.slane %v74, %v86
    %v99 = vunpack.c.l.b16 %v66
    %v100 = vunpack.c.h.b16 %v66
    %v101 = vunpack.c.l.b16 %v67
    %v102 = vunpack.c.l.b16 %v68
    %v103 = vunpack.c.h.b16 %v68
    %v104 = vunpack.c.l.b16 %v69
    %v105 = vunpack.c.l.b16 %v70
    %v106 = vunpack.c.h.b16 %v70
    %v107 = vunpack.c.l.b16 %v71
    %v108 = vunpack.c.l.b16 %v72
    %v109 = vunpack.c.h.b16 %v72
    %v110 = vunpack.c.l.b16 %v73
    %v111 = vpack.c.b16 %v102, %v99
    %v112 = vpack.c.b16 %v103, %v100
    %v113 = vpack.c.b16 %v104, %v101
    %v114 = vpack.c.b16 %v108, %v105
    %v115 = vpack.c.b16 %v109, %v106
    %v116 = vpack.c.b16 %v110, %v107
    %vm123 = vcmask 261120
    %v125 = vsel %vm123, %v65, 0
    %127 = vmatprep.subr.bf16.mxu0 %v112
    %128 = vmatpush1.bf16.msra.mxu0 %v111
    %129 = vmatprep.subr.bf16.mxu0 %v115
    %130 = vmatpush1.bf16.msra.mxu0 %v114
    %131 = vmatprep.subr.bf16.mxu0 0
    %132 = vmatpush1.bf16.msra.mxu0 0
    %133 = vmatprep.subr.bf16.mxu0 0
    %134 = vmatpush1.bf16.msra.mxu0 0
    %135 = vmatprep.subr.bf16.mxu0 0
    %136 = vmatpush1.bf16.msra.mxu0 0
    %137 = vmatprep.subr.bf16.mxu0 0
    %138 = vmatpush1.bf16.msra.mxu0 0
    %139 = vmatprep.subr.bf16.mxu0 0
    %140 = vmatpush1.bf16.msra.mxu0 0
    %141 = vmatprep.subr.bf16.mxu0 0
    %142 = vmatpush1.bf16.msra.mxu0 0
    %143 = vmatprep.subr.bf16.mxu0 0
    %144 = vmatpush1.bf16.msra.mxu0 0
    %145 = vmatprep.subr.bf16.mxu0 0
    %146 = vmatpush1.bf16.msra.mxu0 0
    %147 = vmatprep.subr.bf16.mxu0 0
    %148 = vmatpush1.bf16.msra.mxu0 0
    %149 = vmatprep.subr.bf16.mxu0 0
    %150 = vmatpush1.bf16.msra.mxu0 0
    %151 = vmatprep.subr.bf16.mxu0 0
    %152 = vmatpush1.bf16.msra.mxu0 0
    %153 = vmatprep.subr.bf16.mxu0 0
    %154 = vmatpush1.bf16.msra.mxu0 0
    %155 = vmatprep.subr.bf16.mxu0 0
    %156 = vmatpush1.bf16.msra.mxu0 0
    %157 = vmatprep.subr.bf16.mxu0 0
    %158 = vmatpush1.bf16.msra.mxu0 0
    %159 = vmatprep.mubr.bf16.mxu0 0
    %160 = vmatmul.mubr.bf16.gmra.mrb[0].mxu0 %v125
    %v161 = vpop.f32.mrb[0].mxu0
    %v162 = vadd.f32 %v79, %v161
    %v163 = vpop.f32.mrb[0].mxu0
    %v164 = vadd.f32 %v83, %v163
    %v165 = vpop.f32.mrb[0].mxu0
    %v166 = vpop.f32.mrb[0].mxu0
    %167 = vdwg.mxu0
    %168 = vmatprep.subr.bf16.mxu0 0
    %169 = vmatpush1.bf16.msra.mxu0 %v113
    %170 = vmatprep.subr.bf16.mxu0 0
    %171 = vmatpush1.bf16.msra.mxu0 %v116
    %172 = vmatprep.subr.bf16.mxu0 0
    %173 = vmatpush1.bf16.msra.mxu0 0
    %174 = vmatprep.subr.bf16.mxu0 0
    %175 = vmatpush1.bf16.msra.mxu0 0
    %176 = vmatprep.subr.bf16.mxu0 0
    %177 = vmatpush1.bf16.msra.mxu0 0
    %178 = vmatprep.subr.bf16.mxu0 0
    %179 = vmatpush1.bf16.msra.mxu0 0
    %180 = vmatprep.subr.bf16.mxu0 0
    %181 = vmatpush1.bf16.msra.mxu0 0
    %182 = vmatprep.subr.bf16.mxu0 0
    %183 = vmatpush1.bf16.msra.mxu0 0
    %184 = vmatprep.subr.bf16.mxu0 0
    %185 = vmatpush1.bf16.msra.mxu0 0
    %186 = vmatprep.subr.bf16.mxu0 0
    %187 = vmatpush1.bf16.msra.mxu0 0
    %188 = vmatprep.subr.bf16.mxu0 0
    %189 = vmatpush1.bf16.msra.mxu0 0
    %190 = vmatprep.subr.bf16.mxu0 0
    %191 = vmatpush1.bf16.msra.mxu0 0
    %192 = vmatprep.subr.bf16.mxu0 0
    %193 = vmatpush1.bf16.msra.mxu0 0
    %194 = vmatprep.subr.bf16.mxu0 0
    %195 = vmatpush1.bf16.msra.mxu0 0
    %196 = vmatprep.subr.bf16.mxu0 0
    %197 = vmatpush1.bf16.msra.mxu0 0
    %198 = vmatprep.subr.bf16.mxu0 0
    %199 = vmatpush1.bf16.msra.mxu0 0
    %200 = vmatprep.mubr.bf16.mxu0 0
    %201 = vmatmul.mubr.bf16.gmra.mrb[0].mxu0 %v125
    %v202 = vpop.f32.mrb[0].mxu0
    %v203 = vadd.f32 %v87, %v202
    %v204 = vpop.f32.mrb[0].mxu0
    %v205 = vpop.f32.mrb[0].mxu0
    %v206 = vpop.f32.mrb[0].mxu0
    %207 = vdwg.mxu0
    %v208 = vmax.f32 %v162, 0.0
    %v209 = vmax.f32 %v164, 0.0
    %v210 = vmax.f32 %v203, 0.0
    %vm211 = vcmp.eq.f32.partialorder %v64, 0.0
    %v212 = vsel %vm211, 1, 0
    %v213 = vcvt.s32.f32 %v212
    %v214 = vlaneseq
    %v215 = vand.u32 %v214, 127
    %v216 = vadd.s32 %v215, 128
    %v217 = vadd.s32 %v215, 256
    %vm218 = vcmp.lt.s32.totalorder %v215, 128
    %vm219 = vcmp.lt.s32.totalorder %v216, 128
    %vm220 = vcmp.lt.s32.totalorder %v217, 128
    %v221 = vsel %vm218, 1, 0
    %v222 = vsel %vm219, 1, 0
    %v223 = vsel %vm220, 1, 0
    %v224 = vcvt.s32.f32 %v221
    %v225 = vcvt.s32.f32 %v222
    %v226 = vcvt.s32.f32 %v223
    %vm227 = vcmp.ge.s32.totalorder %v215, 128
    %vm228 = vcmp.ge.s32.totalorder %v216, 128
    %vm229 = vcmp.ge.s32.totalorder %v217, 128
    %vm230 = vcmp.lt.s32.totalorder %v215, 256
    %vm231 = vcmp.lt.s32.totalorder %v216, 256
    %vm232 = vcmp.lt.s32.totalorder %v217, 256
    %vm233 = vmand %vm227, %vm230
    %vm234 = vmand %vm228, %vm231
    %vm235 = vmand %vm229, %vm232
    %v236 = vsel %vm233, 1, 0
    %v237 = vsel %vm234, 1, 0
    %v238 = vsel %vm235, 1, 0
    %v239 = vcvt.s32.f32 %v236
    %v240 = vcvt.s32.f32 %v237
    %v241 = vcvt.s32.f32 %v238
    %vm242 = vcmp.ge.s32.totalorder %v215, 256
    %vm243 = vcmp.ge.s32.totalorder %v216, 256
    %vm244 = vcmp.ge.s32.totalorder %v217, 256
    %v245 = vsel %vm242, 1, 0
    %v246 = vsel %vm243, 1, 0
    %v247 = vsel %vm244, 1, 0
    %v248 = vcvt.s32.f32 %v245
    %v249 = vcvt.s32.f32 %v246
    %v250 = vcvt.s32.f32 %v247
    %252 = vset.pattern.permute.xlu0 31
    %253 = vperm.xlu0 %252, %v213
    %v254 = vpop.permute.xlu0 %253
    %v256 = vmul.f32 %v224, %v254
    %v257 = vmul.f32 %v225, %v254
    %v258 = vmul.f32 %v226, %v254
    %v259 = vsub.f32 1.0, %v213
    %261 = vset.pattern.permute.xlu0 31
    %262 = vperm.xlu0 %261, %v259
    %v263 = vpop.permute.xlu0 %262
    %v265 = vmul.f32 %v239, %v263
    %v266 = vmul.f32 %v240, %v263
    %v267 = vmul.f32 %v241, %v263
    %v268 = vadd.f32 %v256, %v265
    %v269 = vadd.f32 %v257, %v266
    %v270 = vadd.f32 %v258, %v267
    %v271 = vadd.f32 %v268, %v248
    %v272 = vadd.f32 %v269, %v249
    %v273 = vadd.f32 %v270, %v250
    %v274 = vmul.f32 %v208, %v271
    %v275 = vmul.f32 %v209, %v272
    %v276 = vmul.f32 %v210, %v273
    %v277 = vpack.c.bf16 %v274, %v274
    %v278 = vpack.c.bf16 %v275, %v275
    %v279 = vpack.c.bf16 %v276, %v276
    %v280 = vld [vmem:[%s4] sm:$0xf]
    %281 = vset.pattern.permute.xlu0 31
    %282 = vperm.xlu0 %281, %v212
    %v283 = vpop.permute.xlu0 %282
    %vm284 = vcmp.eq.s32.totalorder %v283, 1
    %v286 = vlaneseq
    %v287 = vshrl.u32 %v286, 7
    %v288 = vsub.s32 0, %v287
    %v289 = vrot.slane %v280, %v288
    %v290 = vlaneseq
    %v291 = vshrl.u32 %v290, 7
    %v292 = vsub.s32 2, %v291
    %v293 = vrot.slane %v280, %v292
    %v296 = vlaneseq
    %v297 = vshrl.u32 %v296, 7
    %v298 = vsub.s32 0, %v297
    %v299 = vrot.slane %v289, %v298
    %v300 = vlaneseq
    %v301 = vshrl.u32 %v300, 7
    %v302 = vsub.s32 0, %v301
    %v303 = vrot.slane %v293, %v302
    %v304 = vlaneseq
    %v305 = vshrl.u32 %v304, 7
    %v306 = vsub.s32 1, %v305
    %v307 = vrot.slane %v280, %v306
    %v308 = vlaneseq
    %v309 = vshrl.u32 %v308, 7
    %v310 = vsub.s32 3, %v309
    %v311 = vrot.slane %v280, %v310
    %v314 = vlaneseq
    %v315 = vshrl.u32 %v314, 7
    %v316 = vsub.s32 1, %v315
    %v317 = vrot.slane %v307, %v316
    %v318 = vlaneseq
    %v319 = vshrl.u32 %v318, 7
    %v320 = vsub.s32 1, %v319
    %v321 = vrot.slane %v311, %v320
    %v322 = vsel %vm284, %v299, %v317
    %v323 = vsel %vm284, %v303, %v321
    %v324 = vld [vmem:[#allocation7] sm:$0xff]
    %v325 = vld [vmem:[#allocation7 + $0x8] sm:$0xff]
    %v326 = vld [vmem:[#allocation7 + $0x10] sm:$0xff]
    %v327 = vld [vmem:[#allocation7 + $0x18] sm:$0xff]
    %v328 = vld [vmem:[#allocation7 + $0x20] sm:$0xff]
    %v329 = vld [vmem:[#allocation7 + $0x28] sm:$0xff]
    %v330 = vld [vmem:[#allocation7 + $0x30] sm:$0xff]
    %v331 = vld [vmem:[#allocation7 + $0x38] sm:$0xff]
    %v332 = vld [vmem:[#allocation7 + $0x40] sm:$0xff]
    %v333 = vld [vmem:[#allocation7 + $0x48] sm:$0xff]
    %v334 = vld [vmem:[#allocation7 + $0x50] sm:$0xff]
    %v335 = vld [vmem:[#allocation7 + $0x58] sm:$0xff]
    %v336 = vld [vmem:[#allocation7 + $0x60] sm:$0xff]
    %v337 = vld [vmem:[#allocation7 + $0x68] sm:$0xff]
    %v338 = vld [vmem:[#allocation7 + $0x70] sm:$0xff]
    %v339 = vld [vmem:[#allocation7 + $0x78] sm:$0xff]
    %v340 = vld [vmem:[#allocation7 + $0x80] sm:$0xff]
    %v341 = vld [vmem:[#allocation7 + $0x88] sm:$0xff]
    %v342 = vld [vmem:[#allocation7 + $0x90] sm:$0xff]
    %v343 = vld [vmem:[#allocation7 + $0x98] sm:$0xff]
    %v344 = vld [vmem:[#allocation7 + $0xa0] sm:$0xff]
    %v345 = vld [vmem:[#allocation7 + $0xa8] sm:$0xff]
    %v346 = vld [vmem:[#allocation7 + $0xb0] sm:$0xff]
    %v347 = vld [vmem:[#allocation7 + $0xb8] sm:$0xff]
    %v348 = vld [vmem:[#allocation7 + $0xc0] sm:$0xff]
    %v349 = vld [vmem:[#allocation7 + $0xc8] sm:$0xff]
    %v350 = vld [vmem:[#allocation7 + $0xd0] sm:$0xff]
    %v351 = vld [vmem:[#allocation7 + $0xd8] sm:$0xff]
    %v352 = vld [vmem:[#allocation7 + $0xe0] sm:$0xff]
    %v353 = vld [vmem:[#allocation7 + $0xe8] sm:$0xff]
    %v354 = vld [vmem:[#allocation7 + $0xf0] sm:$0xff]
    %v355 = vld [vmem:[#allocation7 + $0xf8] sm:$0xff]
    %v356 = vld [vmem:[#allocation7 + $0x100] sm:$0xff]
    %v357 = vld [vmem:[#allocation7 + $0x108] sm:$0xff]
    %v358 = vld [vmem:[#allocation7 + $0x110] sm:$0xff]
    %v359 = vld [vmem:[#allocation7 + $0x118] sm:$0xff]
    %v360 = vld [vmem:[#allocation7 + $0x120] sm:$0xff]
    %v361 = vld [vmem:[#allocation7 + $0x128] sm:$0xff]
    %v362 = vld [vmem:[#allocation7 + $0x130] sm:$0xff]
    %v363 = vld [vmem:[#allocation7 + $0x138] sm:$0xff]
    %v364 = vld [vmem:[#allocation7 + $0x140] sm:$0xff]
    %v365 = vld [vmem:[#allocation7 + $0x148] sm:$0xff]
    %v366 = vld [vmem:[#allocation7 + $0x150] sm:$0xff]
    %v367 = vld [vmem:[#allocation7 + $0x158] sm:$0xff]
    %v368 = vld [vmem:[#allocation7 + $0x160] sm:$0xff]
    %v369 = vld [vmem:[#allocation7 + $0x168] sm:$0xff]
    %v370 = vld [vmem:[#allocation7 + $0x170] sm:$0xff]
    %v371 = vld [vmem:[#allocation7 + $0x178] sm:$0xff]
    %v420 = vunpack.c.l.b16 %v324
    %v421 = vunpack.c.h.b16 %v324
    %v422 = vunpack.c.l.b16 %v325
    %v423 = vunpack.c.h.b16 %v325
    %v424 = vunpack.c.l.b16 %v326
    %v425 = vunpack.c.h.b16 %v326
    %v426 = vunpack.c.l.b16 %v327
    %v427 = vunpack.c.h.b16 %v327
    %v428 = vunpack.c.l.b16 %v328
    %v429 = vunpack.c.h.b16 %v328
    %v430 = vunpack.c.l.b16 %v329
    %v431 = vunpack.c.h.b16 %v329
    %v432 = vunpack.c.l.b16 %v330
    %v433 = vunpack.c.h.b16 %v330
    %v434 = vunpack.c.l.b16 %v331
    %v435 = vunpack.c.h.b16 %v331
    %v436 = vunpack.c.l.b16 %v332
    %v437 = vunpack.c.h.b16 %v332
    %v438 = vunpack.c.l.b16 %v333
    %v439 = vunpack.c.h.b16 %v333
    %v440 = vunpack.c.l.b16 %v334
    %v441 = vunpack.c.h.b16 %v334
    %v442 = vunpack.c.l.b16 %v335
    %v443 = vunpack.c.h.b16 %v335
    %v444 = vunpack.c.l.b16 %v336
    %v445 = vunpack.c.h.b16 %v336
    %v446 = vunpack.c.l.b16 %v337
    %v447 = vunpack.c.h.b16 %v337
    %v448 = vunpack.c.l.b16 %v338
    %v449 = vunpack.c.h.b16 %v338
    %v450 = vunpack.c.l.b16 %v339
    %v451 = vunpack.c.h.b16 %v339
    %v452 = vunpack.c.l.b16 %v340
    %v453 = vunpack.c.h.b16 %v340
    %v454 = vunpack.c.l.b16 %v341
    %v455 = vunpack.c.h.b16 %v341
    %v456 = vunpack.c.l.b16 %v342
    %v457 = vunpack.c.h.b16 %v342
    %v458 = vunpack.c.l.b16 %v343
    %v459 = vunpack.c.h.b16 %v343
    %v460 = vunpack.c.l.b16 %v344
    %v461 = vunpack.c.h.b16 %v344
    %v462 = vunpack.c.l.b16 %v345
    %v463 = vunpack.c.h.b16 %v345
    %v464 = vunpack.c.l.b16 %v346
    %v465 = vunpack.c.h.b16 %v346
    %v466 = vunpack.c.l.b16 %v347
    %v467 = vunpack.c.h.b16 %v347
    %v468 = vunpack.c.l.b16 %v348
    %v469 = vunpack.c.h.b16 %v348
    %v470 = vunpack.c.l.b16 %v349
    %v471 = vunpack.c.h.b16 %v349
    %v472 = vunpack.c.l.b16 %v350
    %v473 = vunpack.c.h.b16 %v350
    %v474 = vunpack.c.l.b16 %v351
    %v475 = vunpack.c.h.b16 %v351
    %v476 = vunpack.c.l.b16 %v352
    %v477 = vunpack.c.h.b16 %v352
    %v478 = vunpack.c.l.b16 %v353
    %v479 = vunpack.c.h.b16 %v353
    %v480 = vunpack.c.l.b16 %v354
    %v481 = vunpack.c.h.b16 %v354
    %v482 = vunpack.c.l.b16 %v355
    %v483 = vunpack.c.h.b16 %v355
    %v484 = vunpack.c.l.b16 %v356
    %v485 = vunpack.c.h.b16 %v356
    %v486 = vunpack.c.l.b16 %v357
    %v487 = vunpack.c.h.b16 %v357
    %v488 = vunpack.c.l.b16 %v358
    %v489 = vunpack.c.h.b16 %v358
    %v490 = vunpack.c.l.b16 %v359
    %v491 = vunpack.c.h.b16 %v359
    %v492 = vunpack.c.l.b16 %v360
    %v493 = vunpack.c.h.b16 %v360
    %v494 = vunpack.c.l.b16 %v361
    %v495 = vunpack.c.h.b16 %v361
    %v496 = vunpack.c.l.b16 %v362
    %v497 = vunpack.c.h.b16 %v362
    %v498 = vunpack.c.l.b16 %v363
    %v499 = vunpack.c.h.b16 %v363
    %v500 = vunpack.c.l.b16 %v364
    %v501 = vunpack.c.h.b16 %v364
    %v502 = vunpack.c.l.b16 %v365
    %v503 = vunpack.c.h.b16 %v365
    %v504 = vunpack.c.l.b16 %v366
    %v505 = vunpack.c.h.b16 %v366
    %v506 = vunpack.c.l.b16 %v367
    %v507 = vunpack.c.h.b16 %v367
    %v508 = vunpack.c.l.b16 %v368
    %v509 = vunpack.c.h.b16 %v368
    %v510 = vunpack.c.l.b16 %v369
    %v511 = vunpack.c.h.b16 %v369
    %v512 = vunpack.c.l.b16 %v370
    %v513 = vunpack.c.h.b16 %v370
    %v514 = vunpack.c.l.b16 %v371
    %v515 = vunpack.c.h.b16 %v371
    %v516 = vpack.c.b16 %v422, %v420
    %v517 = vpack.c.b16 %v423, %v421
    %v518 = vpack.c.b16 %v426, %v424
    %v519 = vpack.c.b16 %v427, %v425
    %v520 = vpack.c.b16 %v430, %v428
    %v521 = vpack.c.b16 %v431, %v429
    %v522 = vpack.c.b16 %v434, %v432
    %v523 = vpack.c.b16 %v435, %v433
    %v524 = vpack.c.b16 %v438, %v436
    %v525 = vpack.c.b16 %v439, %v437
    %v526 = vpack.c.b16 %v442, %v440
    %v527 = vpack.c.b16 %v443, %v441
    %v528 = vpack.c.b16 %v446, %v444
    %v529 = vpack.c.b16 %v447, %v445
    %v530 = vpack.c.b16 %v450, %v448
    %v531 = vpack.c.b16 %v451, %v449
    %v532 = vpack.c.b16 %v454, %v452
    %v533 = vpack.c.b16 %v455, %v453
    %v534 = vpack.c.b16 %v458, %v456
    %v535 = vpack.c.b16 %v459, %v457
    %v536 = vpack.c.b16 %v462, %v460
    %v537 = vpack.c.b16 %v463, %v461
    %v538 = vpack.c.b16 %v466, %v464
    %v539 = vpack.c.b16 %v467, %v465
    %v540 = vpack.c.b16 %v470, %v468
    %v541 = vpack.c.b16 %v471, %v469
    %v542 = vpack.c.b16 %v474, %v472
    %v543 = vpack.c.b16 %v475, %v473
    %v544 = vpack.c.b16 %v478, %v476
    %v545 = vpack.c.b16 %v479, %v477
    %v546 = vpack.c.b16 %v482, %v480
    %v547 = vpack.c.b16 %v483, %v481
    %v548 = vpack.c.b16 %v486, %v484
    %v549 = vpack.c.b16 %v487, %v485
    %v550 = vpack.c.b16 %v490, %v488
    %v551 = vpack.c.b16 %v491, %v489
    %v552 = vpack.c.b16 %v494, %v492
    %v553 = vpack.c.b16 %v495, %v493
    %v554 = vpack.c.b16 %v498, %v496
    %v555 = vpack.c.b16 %v499, %v497
    %v556 = vpack.c.b16 %v502, %v500
    %v557 = vpack.c.b16 %v503, %v501
    %v558 = vpack.c.b16 %v506, %v504
    %v559 = vpack.c.b16 %v507, %v505
    %v560 = vpack.c.b16 %v510, %v508
    %v561 = vpack.c.b16 %v511, %v509
    %v562 = vpack.c.b16 %v514, %v512
    %v563 = vpack.c.b16 %v515, %v513
    %612 = vmatprep.subr.bf16.mxu0 %v517
    %613 = vmatpush1.bf16.msra.mxu0 %v516
    %614 = vmatprep.subr.bf16.mxu0 %v519
    %615 = vmatpush1.bf16.msra.mxu0 %v518
    %616 = vmatprep.subr.bf16.mxu0 %v521
    %617 = vmatpush1.bf16.msra.mxu0 %v520
    %618 = vmatprep.subr.bf16.mxu0 %v523
    %619 = vmatpush1.bf16.msra.mxu0 %v522
    %620 = vmatprep.subr.bf16.mxu0 %v525
    %621 = vmatpush1.bf16.msra.mxu0 %v524
    %622 = vmatprep.subr.bf16.mxu0 %v527
    %623 = vmatpush1.bf16.msra.mxu0 %v526
    %624 = vmatprep.subr.bf16.mxu0 %v529
    %625 = vmatpush1.bf16.msra.mxu0 %v528
    %626 = vmatprep.subr.bf16.mxu0 %v531
    %627 = vmatpush1.bf16.msra.mxu0 %v530
    %628 = vmatprep.subr.bf16.mxu0 %v533
    %629 = vmatpush1.bf16.msra.mxu0 %v532
    %630 = vmatprep.subr.bf16.mxu0 %v535
    %631 = vmatpush1.bf16.msra.mxu0 %v534
    %632 = vmatprep.subr.bf16.mxu0 %v537
    %633 = vmatpush1.bf16.msra.mxu0 %v536
    %634 = vmatprep.subr.bf16.mxu0 %v539
    %635 = vmatpush1.bf16.msra.mxu0 %v538
    %636 = vmatprep.subr.bf16.mxu0 %v541
    %637 = vmatpush1.bf16.msra.mxu0 %v540
    %638 = vmatprep.subr.bf16.mxu0 %v543
    %639 = vmatpush1.bf16.msra.mxu0 %v542
    %640 = vmatprep.subr.bf16.mxu0 %v545
    %641 = vmatpush1.bf16.msra.mxu0 %v544
    %642 = vmatprep.subr.bf16.mxu0 %v547
    %643 = vmatpush1.bf16.msra.mxu0 %v546
    %644 = vmatprep.mubr.bf16.mxu0 %v278
    %645 = vmatmul.mubr.bf16.gmra.mrb[0].mxu0 %v277
    %v646 = vpop.f32.mrb[0].mxu0
    %v647 = vadd.f32 %v322, %v646
    %v648 = vpop.f32.mrb[0].mxu0
    %v649 = vadd.f32 %v323, %v648
    %v650 = vpop.f32.mrb[0].mxu0
    %v651 = vpop.f32.mrb[0].mxu0
    %652 = vdwg.mxu0
    %653 = vmatprep.subr.bf16.mxu0 %v549
    %654 = vmatpush1.bf16.msra.mxu0 %v548
    %655 = vmatprep.subr.bf16.mxu0 %v551
    %656 = vmatpush1.bf16.msra.mxu0 %v550
    %657 = vmatprep.subr.bf16.mxu0 %v553
    %658 = vmatpush1.bf16.msra.mxu0 %v552
    %659 = vmatprep.subr.bf16.mxu0 %v555
    %660 = vmatpush1.bf16.msra.mxu0 %v554
    %661 = vmatprep.subr.bf16.mxu0 %v557
    %662 = vmatpush1.bf16.msra.mxu0 %v556
    %663 = vmatprep.subr.bf16.mxu0 %v559
    %664 = vmatpush1.bf16.msra.mxu0 %v558
    %665 = vmatprep.subr.bf16.mxu0 %v561
    %666 = vmatpush1.bf16.msra.mxu0 %v560
    %667 = vmatprep.subr.bf16.mxu0 %v563
    %668 = vmatpush1.bf16.msra.mxu0 %v562
    %669 = vmatprep.subr.bf16.mxu0 0
    %670 = vmatpush1.bf16.msra.mxu0 0
    %671 = vmatprep.subr.bf16.mxu0 0
    %672 = vmatpush1.bf16.msra.mxu0 0
    %673 = vmatprep.subr.bf16.mxu0 0
    %674 = vmatpush1.bf16.msra.mxu0 0
    %675 = vmatprep.subr.bf16.mxu0 0
    %676 = vmatpush1.bf16.msra.mxu0 0
    %677 = vmatprep.subr.bf16.mxu0 0
    %678 = vmatpush1.bf16.msra.mxu0 0
    %679 = vmatprep.subr.bf16.mxu0 0
    %680 = vmatpush1.bf16.msra.mxu0 0
    %681 = vmatprep.subr.bf16.mxu0 0
    %682 = vmatpush1.bf16.msra.mxu0 0
    %683 = vmatprep.subr.bf16.mxu0 0
    %684 = vmatpush1.bf16.msra.mxu0 0
    %685 = vmatprep.mubr.bf16.mxu0 0
    %686 = vmatmul.mubr.bf16.gmra.mrb[0].mxu0 %v279
    %v687 = vpop.f32.mrb[0].mxu0
    %v688 = vadd.f32 %v647, %v687
    %v689 = vpop.f32.mrb[0].mxu0
    %v690 = vadd.f32 %v649, %v689
    %v691 = vpop.f32.mrb[0].mxu0
    %v692 = vpop.f32.mrb[0].mxu0
    %693 = vdwg.mxu0
    %694 = vst [vmem:[#allocation8] sm:$0xff] %v688
    %v695 = vmax.f32 %v690, 0.0
    %696 = vst [vmem:[#allocation9] sm:$0xff] %v695
    // Predicated region
    $region34: #{tpu_custom_call.1} parent=1 // pred_check
      _
    $region35: #{tpu_custom_call.1} parent=1 // pred_check_branch
      %698 = sbr.rel (0) target = $region37
    $region36: #{tpu_custom_call.1} parent=1 // pred_region
      %s700 = ssub.s32 128, 128
      %701 = vsyncadd [#allocation4], %s700
      %s703 = sshll.u32 [#allocation8], 4
      %s704 = int_to_ptr.vmem [resolvable:$true] %s703
      %706 = dma.vmem_to_hbm [thread:$0]  %s704, 128, %s5, [#allocation4]
    $region37: #{tpu_custom_call.1} parent=1 // pred_fallthru
      _
    // Predicated region
    $region38: #{tpu_custom_call.1} parent=1 // pred_check
      _
    $region39: #{tpu_custom_call.1} parent=1 // pred_check_branch
      %708 = sbr.rel (0) target = $region41
    $region40: #{tpu_custom_call.1} parent=1 // pred_region
      %s710 = ssub.s32 128, 128
      %711 = vsyncadd [#allocation10], %s710
      %s713 = sshll.u32 [#allocation9], 4
      %s714 = int_to_ptr.vmem [resolvable:$true] %s713
      %716 = dma.vmem_to_hbm [thread:$0]  %s714, 128, %s6, [#allocation10]
    $region41: #{tpu_custom_call.1} parent=1 // pred_fallthru
      _
    // Predicated region
    $region42: #{tpu_custom_call.1} parent=1 // pred_check
      _
    $region43: #{tpu_custom_call.1} parent=1 // pred_check_branch
      %718 = sbr.rel (0) target = $region45
    $region44: #{tpu_custom_call.1} parent=1 // pred_region
      %719 = dma.done [#allocation4], 128
    $region45: #{tpu_custom_call.1} parent=1 // pred_fallthru
      _
    // Predicated region
    $region46: #{tpu_custom_call.1} parent=1 // pred_check
      _
    $region47: #{tpu_custom_call.1} parent=1 // pred_check_branch
      %721 = sbr.rel (0) target = $region49
    $region48: #{tpu_custom_call.1} parent=1 // pred_region
      %722 = dma.done [#allocation10], 128
    $region49: #{tpu_custom_call.1} parent=1 // pred_fallthru
      _
    %723 = vsyncpa [#allocation3], 1
    %724 = vsyncpa [#allocation6], 1
    %725 = vsyncpa [#allocation4], 1
    %726 = vsyncpa [#allocation10], 1

</llo_original>
